<compile_context>
chip_gen: v7x
topology: tpu7x:2x2x1
jax: 0.10.0
libtpu: 0.0.40
codegen_flags: <defaults>
</compile_context>

<pallas_src>
import functools

import jax
import jax.numpy as jnp
from jax.experimental import pallas as pl
from jax.experimental.pallas import tpu as pltpu


def _focal_loss_kernel(n_ref, x_ref, t_ref, a_ref, o_ref, *, gamma, tile_rows):
    x = x_ref[...]          # (TN, C)  logits block, native dtype (f32 or bf16)
    t = t_ref[...]          # (TN, 1)  int32 targets block
    alpha_i = a_ref[...]    # (TN, 1)  f32 alpha[target] block (gathered in wrapper)

    tn, cc = x.shape

    # lane-only class iota; broadcasts against the (TN, 1) targets
    col = jax.lax.broadcasted_iota(jnp.int32, (1, cc), 1)
    hit = col == t                                                  # (TN, C) bool

    # one-hot masked lane-sum extracts the target logit (exact in any dtype:
    # only one nonzero lane); upcast the (TN, 1) result for the scalar math.
    x_t = jnp.sum(jnp.where(hit, x, 0), axis=1, keepdims=True)
    x_t = x_t.astype(jnp.float32)

    # logit-domain focal loss (O(TN) transcendentals, numerically stable):
    #   p = sigmoid(x_t); log(p) = -softplus(-x_t); (1-p)^g = exp(-g*softplus(x_t))
    # stable softplus(z) = max(z, 0) + log(1 + exp(-|z|))
    sp_pos = jnp.maximum(x_t, 0.0) + jnp.log(1.0 + jnp.exp(-jnp.abs(x_t)))
    sp_neg = sp_pos - x_t                        # softplus(-x_t) = -log(p)
    row_loss = alpha_i * jnp.exp(-gamma * sp_pos) * sp_neg

    # neutralize rows of the ragged edge block (select AFTER the math so any
    # garbage in out-of-bounds rows is replaced, never multiplied/accumulated)
    n_true = n_ref[0]
    row = pl.program_id(0) * tile_rows + jax.lax.broadcasted_iota(
        jnp.int32, (tn, 1), 0)
    row_loss = jnp.where(row < n_true, row_loss, 0.0)

    o_ref[...] = jnp.broadcast_to(jnp.sum(row_loss), (1, 1, 128))


def focal_loss(inputs, targets, alpha, gamma=1.5, size_average=True,
               tile_rows=None):
    """inputs: (N, C) logits; targets: (N,) int class ids; alpha: (C,) factors."""
    n, c = inputs.shape
    itemsize = jnp.dtype(inputs.dtype).itemsize
    c_store = max(128, ((c + 127) // 128) * 128)   # lane-padded VMEM width

    if tile_rows is None:
        # ~8 MiB of logits per block (x2 double-buffering = 16 MiB, within the
        # 32 MiB vmem limit requested below on every generation).
        target_bytes = 8 * 1024 * 1024
        tile_rows = max(8, (target_bytes // (c_store * itemsize)) // 8 * 8)
        # keep >= 2 grid steps so v7x's two TensorCores both get work
        half = ((-(-n // 2)) + 7) // 8 * 8
        tile_rows = min(tile_rows, max(8, half))
    tile_rows = max(1, int(tile_rows))
    if tile_rows >= n:
        tile_rows = n                      # single block == full dim (legal)
    else:
        tile_rows = max(8, (tile_rows // 8) * 8)

    grid = pl.cdiv(n, tile_rows)

    # tiny wrapper-side tensors (no logits copy / pad / upcast)
    n_arr = jnp.array([n], dtype=jnp.int32)
    t_2d = targets.reshape(n, 1).astype(jnp.int32)
    a_flat = jnp.asarray(alpha, dtype=jnp.float32).reshape(-1)
    a_2d = a_flat[targets].reshape(n, 1)          # alpha[target], (N, 1) f32

    kernel = functools.partial(_focal_loss_kernel, gamma=float(gamma),
                               tile_rows=int(tile_rows))

    partials = pl.pallas_call(
        kernel,
        out_shape=jax.ShapeDtypeStruct((grid, 1, 128), jnp.float32),
        grid=(grid,),
        in_specs=[
            pl.BlockSpec(memory_space=pltpu.MemorySpace.SMEM),   # n_true scalar
            pl.BlockSpec((tile_rows, c), lambda i: (i, 0)),      # logits (native dtype)
            pl.BlockSpec((tile_rows, 1), lambda i: (i, 0)),      # targets
            pl.BlockSpec((tile_rows, 1), lambda i: (i, 0)),      # alpha[target]
        ],
        out_specs=pl.BlockSpec((1, 1, 128), lambda i: (i, 0, 0)),
        compiler_params=pltpu.CompilerParams(
            dimension_semantics=("parallel",),
            vmem_limit_bytes=32 * 1024 * 1024),
    )(n_arr, inputs, t_2d, a_2d)

    total = jnp.sum(partials[:, 0, 0])
    return total / float(n) if size_average else total


def _focal_loss_ref(inputs, targets, alpha, gamma=1.5, size_average=True):
    """Pure-JAX reference mirroring the PyTorch forward."""
    n, c = inputs.shape
    x = inputs.astype(jnp.float32)
    p = jax.nn.sigmoid(x)
    mask = jax.nn.one_hot(targets, c, dtype=jnp.float32)
    probs = jnp.sum(p * mask, axis=1, keepdims=True)
    alpha_i = jnp.asarray(alpha, jnp.float32)[targets].reshape(n, 1)
    batch_loss = -alpha_i * jnp.power(1.0 - probs, gamma) * jnp.log(probs)
    return jnp.mean(batch_loss) if size_average else jnp.sum(batch_loss)


if __name__ == "__main__":
    key = jax.random.PRNGKey(0)
    k1, k2, k3, k4 = jax.random.split(key, 4)

    GAMMA = 1.5

    # Case 1: module config (class_num=32, alpha=1, batch=8), size_average=True
    N, C = 8, 32
    inputs = jax.random.normal(k1, (N, C), dtype=jnp.float32)
    targets = jax.random.randint(k2, (N,), 0, C, dtype=jnp.int32)
    alpha = jnp.full((C,), 1.0, dtype=jnp.float32)

    loss = jax.block_until_ready(
        focal_loss(inputs, targets, alpha, gamma=GAMMA, size_average=True))
    ref = _focal_loss_ref(inputs, targets, alpha, gamma=GAMMA, size_average=True)
    assert jnp.allclose(loss, ref, rtol=1e-4, atol=1e-6), (loss, ref)

    # Case 2: multi-block grid with a ragged edge block (N=20, tile_rows=8),
    # non-uniform alpha, sum reduction
    N2, C2 = 20, 32
    inputs2 = jax.random.normal(k3, (N2, C2), dtype=jnp.float32)
    targets2 = jax.random.randint(k4, (N2,), 0, C2, dtype=jnp.int32)
    alpha2 = jnp.linspace(0.25, 2.0, C2, dtype=jnp.float32)

    loss2 = jax.block_until_ready(
        focal_loss(inputs2, targets2, alpha2, gamma=GAMMA, size_average=False,
                   tile_rows=8))
    ref2 = _focal_loss_ref(inputs2, targets2, alpha2, gamma=GAMMA,
                           size_average=False)
    assert jnp.allclose(loss2, ref2, rtol=1e-4, atol=1e-6), (loss2, ref2)

    # Case 3: native bf16 streaming (logits stay bf16 in HBM; math in f32)
    inputs3 = inputs2.astype(jnp.bfloat16)
    loss3 = jax.block_until_ready(
        focal_loss(inputs3, targets2, alpha2, gamma=GAMMA, size_average=True))
    ref3 = _focal_loss_ref(inputs3, targets2, alpha2, gamma=GAMMA,
                           size_average=True)
    assert jnp.allclose(loss3, ref3, rtol=2e-3, atol=1e-5), (loss3, ref3)

    print("KERNEL_OK")
</pallas_src>

<mosaic_0001>
module attributes {stable_mosaic.version = 11 : i64} {
  func.func @_focal_loss_kernel(%arg0: i32, %arg1: memref<1xi32, #tpu.memory_space<smem>>, %arg2: memref<8x32xf32, #tpu.memory_space<vmem>>, %arg3: memref<8x1xi32, #tpu.memory_space<vmem>>, %arg4: memref<8x1xf32, #tpu.memory_space<vmem>>, %arg5: memref<1x1x128xf32, #tpu.memory_space<vmem>>) attributes {dimension_semantics = [#tpu.dimension_semantics<parallel>], iteration_bounds = array<i64: 1>, scalar_prefetch = 0 : i64, scratch_operands = 0 : i64, tpu.core_type = #tpu.core_type<tc>, window_params = [{transform_indices = @transform_0, window_bounds = array<i64: 1>}, {transform_indices = @transform_1, window_bounds = array<i64: 8, 32>}, {transform_indices = @transform_2, window_bounds = array<i64: 8, 1>}, {transform_indices = @transform_3, window_bounds = array<i64: 8, 1>}, {transform_indices = @transform_4, window_bounds = array<i64: 1, 1, 128>}]} {
    %c0 = arith.constant 0 : index
    %c0_0 = arith.constant 0 : index
    %0 = vector.load %arg2[%c0, %c0_0] : memref<8x32xf32, #tpu.memory_space<vmem>>, vector<8x32xf32>
    %c0_1 = arith.constant 0 : index
    %c0_2 = arith.constant 0 : index
    %1 = vector.load %arg3[%c0_1, %c0_2] : memref<8x1xi32, #tpu.memory_space<vmem>>, vector<8x1xi32>
    %c0_3 = arith.constant 0 : index
    %c0_4 = arith.constant 0 : index
    %2 = vector.load %arg4[%c0_3, %c0_4] : memref<8x1xf32, #tpu.memory_space<vmem>>, vector<8x1xf32>
    %3 = tpu.iota {dimensions = array<i32: 1>} : vector<1x32xi32>
    %4 = vector.broadcast %3 : vector<1x32xi32> to vector<8x32xi32>
    %5 = vector.broadcast %1 : vector<8x1xi32> to vector<8x32xi32>
    %6 = arith.cmpi eq, %4, %5 : vector<8x32xi32>
    %c0_i32 = arith.constant 0 : i32
    %7 = arith.sitofp %c0_i32 : i32 to f32
    %8 = vector.broadcast %7 : f32 to vector<8x32xf32>
    %9 = arith.select %6, %0, %8 : vector<8x32xi1>, vector<8x32xf32>
    %cst = arith.constant dense<0.000000e+00> : vector<8xf32>
    %10 = vector.multi_reduction <add>, %9, %cst [1] : vector<8x32xf32> to vector<8xf32>
    %11 = vector.shape_cast %10 : vector<8xf32> to vector<8x1xf32>
    %cst_5 = arith.constant 0.000000e+00 : f32
    %12 = vector.broadcast %cst_5 : f32 to vector<8x1xf32>
    %13 = arith.maximumf %11, %12 : vector<8x1xf32>
    %14 = math.absf %11 : vector<8x1xf32>
    %cst_6 = arith.constant 0.000000e+00 : f32
    %15 = vector.broadcast %cst_6 : f32 to vector<8x1xf32>
    %16 = arith.subf %15, %14 : vector<8x1xf32>
    %17 = math.exp %16 : vector<8x1xf32>
    %cst_7 = arith.constant 1.000000e+00 : f32
    %18 = vector.broadcast %cst_7 : f32 to vector<8x1xf32>
    %19 = arith.addf %18, %17 : vector<8x1xf32>
    %20 = math.log %19 : vector<8x1xf32>
    %21 = arith.addf %13, %20 : vector<8x1xf32>
    %22 = arith.subf %21, %11 : vector<8x1xf32>
    %cst_8 = arith.constant -1.500000e+00 : f32
    %23 = vector.broadcast %cst_8 : f32 to vector<8x1xf32>
    %24 = arith.mulf %23, %21 : vector<8x1xf32>
    %25 = math.exp %24 : vector<8x1xf32>
    %26 = arith.mulf %2, %25 : vector<8x1xf32>
    %27 = arith.mulf %26, %22 : vector<8x1xf32>
    %c0_9 = arith.constant 0 : index
    %28 = memref.load %arg1[%c0_9] : memref<1xi32, #tpu.memory_space<smem>>
    %c8_i32 = arith.constant 8 : i32
    %29 = arith.muli %arg0, %c8_i32 : i32
    %30 = tpu.iota {dimensions = array<i32: 0>} : vector<8x1xi32>
    %31 = vector.broadcast %29 : i32 to vector<8x1xi32>
    %32 = arith.addi %31, %30 : vector<8x1xi32>
    %33 = vector.broadcast %28 : i32 to vector<8x1xi32>
    %34 = arith.cmpi slt, %32, %33 : vector<8x1xi32>
    %cst_10 = arith.constant 0.000000e+00 : f32
    %35 = vector.broadcast %cst_10 : f32 to vector<8x1xf32>
    %36 = arith.select %34, %27, %35 : vector<8x1xi1>, vector<8x1xf32>
    %37 = vector.shape_cast %36 : vector<8x1xf32> to vector<1x8x1xf32>
    %cst_11 = arith.constant dense<0.000000e+00> : vector<1xf32>
    %38 = vector.multi_reduction <add>, %37, %cst_11 [1, 2] : vector<1x8x1xf32> to vector<1xf32>
    %39 = vector.shape_cast %38 : vector<1xf32> to vector<1x1x1xf32>
    %40 = vector.extract %39[0, 0, 0] : f32 from vector<1x1x1xf32>
    %41 = vector.broadcast %40 : f32 to vector<1x1x128xf32>
    %c0_12 = arith.constant 0 : index
    %c0_13 = arith.constant 0 : index
    %c0_14 = arith.constant 0 : index
    %42 = vector.load %arg5[%c0_12, %c0_13, %c0_14] : memref<1x1x128xf32, #tpu.memory_space<vmem>>, vector<1x1x128xf32>
    tpu.vector_store %arg5[%c0_12, %c0_13, %c0_14], %41 {strides = array<i32>} : memref<1x1x128xf32, #tpu.memory_space<vmem>>, vector<1x1x128xf32>,
    return
  }
  func.func @transform_0(%arg0: i32) -> i32 {
    %c0_i32 = arith.constant 0 : i32
    %c0_i32_0 = arith.constant 0 : i32
    return %c0_i32 : i32
  }
  func.func @transform_1(%arg0: i32) -> (i32, i32) {
    %c0_i32 = arith.constant 0 : i32
    %c0_i32_0 = arith.constant 0 : i32
    return %arg0, %c0_i32 : i32, i32
  }
  func.func @transform_2(%arg0: i32) -> (i32, i32) {
    %c0_i32 = arith.constant 0 : i32
    %c0_i32_0 = arith.constant 0 : i32
    return %arg0, %c0_i32 : i32, i32
  }
  func.func @transform_3(%arg0: i32) -> (i32, i32) {
    %c0_i32 = arith.constant 0 : i32
    %c0_i32_0 = arith.constant 0 : i32
    return %arg0, %c0_i32 : i32, i32
  }
  func.func @transform_4(%arg0: i32) -> (i32, i32, i32) {
    %c0_i32 = arith.constant 0 : i32
    %c0_i32_0 = arith.constant 0 : i32
    %c0_i32_1 = arith.constant 0 : i32
    return %arg0, %c0_i32, %c0_i32_0 : i32, i32, i32
  }
}

</mosaic_0001>

<llo_original>
// kernel: tpu_custom_call.1
$region0: #{tpu_custom_call.1}
  #allocation0 [shape = 'u32[]', space=smem, size = 0x4, offset = 0x4, fixed_abs, tag = 'smem constant byte address 0x4 - core index']
  #allocation1 [shape = 'u32[144,128]{1,0:T(1,128)}', space=vmem, size = 0x12000, scoped, tag = 'internal scratch']
  #allocation2 [shape = 's32[1]{0:T(128)S(6)}', space=smem, size = 0x200, scoped, tag = 'scoped memory for tpu_custom_call.1']
  %s0 = inlined_call_operand.<no memory space> [shape: s32[1], index: 0, kind: input, shape index: {}]
  %s1 = inlined_call_operand.vmem [shape: f32[8,32], index: 1, kind: input, shape index: {}]
  %s2 = inlined_call_operand.vmem [shape: s32[8,1], index: 2, kind: input, shape index: {}]
  %s3 = inlined_call_operand.vmem [shape: f32[8,1], index: 3, kind: input, shape index: {}]
  %s4 = inlined_call_operand.hbm [shape: f32[1,1,128], index: 4, kind: output, shape index: {}]
  %s5 = sld [smem:[#allocation0]]
  $region26: #{tpu_custom_call.1} parent=0
    _
  %s7 = ssub.s32 1, %s5
  %s8 = scalar_select 0, %s7, %s5
  %9 = sst [smem:[#allocation2]] %s0
  $region1: #{tpu_custom_call.1} parent=0
    #allocation3 [shape = 'u8[512]{0}', space=vmem, size = 0x400, scoped, tag = 'output window, operand 0, single buffered']
    #allocation4 [shape = 's32[1]{0}', space=sflag, size = 0x4, scoped, tag = 'scoped memory for tpu_custom_call.1']
    %10 = vsyncpa [#allocation4], 0
    // Predicated region
    $region2: #{tpu_custom_call.1} parent=1 // pred_check
      _
    $region3: #{tpu_custom_call.1} parent=1 // pred_check_branch
      %12 = sbr.rel (0) target = $region5
    $region4: #{tpu_custom_call.1} parent=1 // pred_region
      _
    $region5: #{tpu_custom_call.1} parent=1 // pred_fallthru
      _
    // Predicated region
    $region6: #{tpu_custom_call.1} parent=1 // pred_check
      _
    $region7: #{tpu_custom_call.1} parent=1 // pred_check_branch
      %14 = sbr.rel (0) target = $region9
    $region8: #{tpu_custom_call.1} parent=1 // pred_region
      _
    $region9: #{tpu_custom_call.1} parent=1 // pred_fallthru
      _
    // Predicated region
    $region10: #{tpu_custom_call.1} parent=1 // pred_check
      _
    $region11: #{tpu_custom_call.1} parent=1 // pred_check_branch
      %16 = sbr.rel (0) target = $region13
    $region12: #{tpu_custom_call.1} parent=1 // pred_region
      _
    $region13: #{tpu_custom_call.1} parent=1 // pred_fallthru
      _
    // Predicated region
    $region14: #{tpu_custom_call.1} parent=1 // pred_check
      _
    $region15: #{tpu_custom_call.1} parent=1 // pred_check_branch
      %18 = sbr.rel (0) target = $region17
    $region16: #{tpu_custom_call.1} parent=1 // pred_region
      _
    $region17: #{tpu_custom_call.1} parent=1 // pred_fallthru
      _
    %v19 = vld [vmem:[%s1] sm:$0xff]
    %v20 = vld [vmem:[%s2] sm:$0xff]
    %v21 = vld [vmem:[%s3] sm:$0xff]
    %v22 = vlaneseq
    %v23 = vand.u32 %v22, 127
    %24 = vset.pattern.permute.xlu0 0
    %25 = vperm.xlu0 %24, %v20
    %v26 = vpop.permute.xlu0 %25
    %vm27 = vcmp.eq.s32.totalorder %v23, %v26
    %v28 = vsel %vm27, %v19, 0.0
    %vm29 = vcmask 261120
    %v30 = vsel %vm29, %v28, 0.0
    %31 = vadd.xlane.f32.xlu0 %v30
    %v32 = vpop.xlane.xlu0 %31
    %v33 = vmax.f32 %v32, 0.0
    %v34 = vand.u32 2147483647, %v32
    %v35 = vsub.f32 0.0, %v34
    %v36 = vmul.f32 %v35, 1.442695
    %v37 = vpow.pop %v36
    %v38 = vadd.f32 %v37, 1.0
    %v39 = vlog2.pop %v38
    %v40 = vmul.f32 %v39, 0.6931472
    %v41 = vadd.f32 %v33, %v40
    %v42 = vsub.f32 %v41, %v32
    %v43 = vmul.f32 %v41, -1.5
    %v44 = vmul.f32 %v43, 1.442695
    %v45 = vpow.pop %v44
    %v46 = vmul.f32 %v21, %v45
    %v47 = vmul.f32 %v46, %v42
    %s48 = sld [smem:[#allocation2]]
    %s49 = smul.u32 0, 8
    %v50 = vlaneseq
    %v51 = vshrl.u32 %v50, 7
    %v52 = vstv %s49
    %v53 = vadd.s32 %v52, %v51
    %v54 = vstv %s48
    %vm55 = vcmp.lt.s32.totalorder %v53, %v54
    %v56 = vsel %vm55, %v47, 0.0
    %vm57 = vcmask 7168
    %v58 = vsel %vm57, %v56, 0.0
    %59 = vadd.xlane.f32.xlu0 %v58
    %v60 = vpop.xlane.xlu0 %59
    %v61 = vrot.slane %v60, 4
    %v62 = vadd.f32 %v60, %v61
    %v63 = vrot.slane %v62, 2
    %v64 = vadd.f32 %v62, %v63
    %v65 = vrot.slane %v64, 1
    %v66 = vadd.f32 %v64, %v65
    %s67 = vtos %v66
    %v68 = vstv %s67
    %69 = vst [vmem:[#allocation3] sm:$0x1] %v68
    // Predicated region
    $region18: #{tpu_custom_call.1} parent=1 // pred_check
      _
    $region19: #{tpu_custom_call.1} parent=1 // pred_check_branch
      %71 = sbr.rel (0) target = $region21
    $region20: #{tpu_custom_call.1} parent=1 // pred_region
      %s73 = ssub.s32 16, 16
      %74 = vsyncadd [#allocation4], %s73
      %s76 = sshll.u32 [#allocation3], 4
      %s77 = int_to_ptr.vmem [resolvable:$true] %s76
      %79 = dma.vmem_to_hbm [thread:$0]  %s77, 16, %s4, [#allocation4]
    $region21: #{tpu_custom_call.1} parent=1 // pred_fallthru
      _
    // Predicated region
    $region22: #{tpu_custom_call.1} parent=1 // pred_check
      _
    $region23: #{tpu_custom_call.1} parent=1 // pred_check_branch
      %81 = sbr.rel (0) target = $region25
    $region24: #{tpu_custom_call.1} parent=1 // pred_region
      %82 = dma.done [#allocation4], 16
    $region25: #{tpu_custom_call.1} parent=1 // pred_fallthru
      _
    %83 = vsyncpa [#allocation4], 1

</llo_original>
